<compile_context>
chip_gen: v5e
topology: v5e:2x2
jax: 0.10.0
libtpu: 0.0.40
codegen_flags: <defaults>
</compile_context>

<pallas_src>
import functools

import jax
import jax.numpy as jnp
from jax.experimental import pallas as pl
from jax.experimental.pallas import tpu as pltpu


def _l1_gamma_kernel(pred_ref, targ_ref, out_ref, *,
                     inv_gamma, tile_rows, blocks_per_core, n_blocks,
                     rows_valid, mask_rows):
    c = pl.program_id(0)                       # core-split (parallel) axis
    i = pl.program_id(1)                       # sequential reduction axis
    blk = c * blocks_per_core + i              # logical block id (may be phantom)

    @pl.when(i == 0)
    def _():
        out_ref[...] = jnp.zeros_like(out_ref)

    # Fused upper clamp + gamma compression x ** (1/gamma) == exp(log(x)/gamma).
    # The x > 0 select covers the lower clamp AND discards NaN/Inf coming from
    # log(<=0) or from unspecified rows of a partial tail block.
    p = jnp.minimum(pred_ref[...].astype(jnp.float32), 1.0)
    t = jnp.minimum(targ_ref[...].astype(jnp.float32), 1.0)
    pg = jnp.where(p > 0.0, jnp.exp(inv_gamma * jnp.log(p)), 0.0)
    tg = jnp.where(t > 0.0, jnp.exp(inv_gamma * jnp.log(t)), 0.0)
    d = jnp.abs(pg - tg)

    def _accum(x):
        # Layout-preserving sublane-group split + vreg-wise adds (pure VPU).
        out_ref[...] += x.reshape(-1, 8, 128).sum(axis=0)

    is_real = blk < n_blocks
    if mask_rows:
        is_last = blk == (n_blocks - 1)

        @pl.when(jnp.logical_and(is_real, jnp.logical_not(is_last)))
        def _():
            _accum(d)

        @pl.when(jnp.logical_and(is_real, is_last))
        def _():
            # Only the last real block has rows past the flattened input end.
            row_ids = blk * tile_rows + jax.lax.broadcasted_iota(
                jnp.int32, d.shape, 0)
            _accum(jnp.where(row_ids < rows_valid, d, 0.0))
    else:
        @pl.when(is_real)
        def _():
            _accum(d)


def l1_with_gamma(prediction, target, gamma=2.2, *, max_tile_rows=2048,
                  num_cores=2):
    """Scalar L1 loss of gamma-compressed, clamped inputs (any shape)."""
    assert prediction.shape == target.shape
    n_elems = prediction.size
    lanes, sublanes = 128, 8
    quantum = lanes * sublanes

    p_flat = prediction.reshape(-1)
    t_flat = target.reshape(-1)
    pad = (-n_elems) % quantum
    if pad:
        # Rare small fallback copy (only when numel % 1024 != 0). Zero padding
        # contributes |0 - 0| = 0 to the sum.
        p_flat = jnp.pad(p_flat, (0, pad))
        t_flat = jnp.pad(t_flat, (0, pad))
    rows = (n_elems + pad) // lanes            # multiple of 8 by construction
    p2d = p_flat.reshape(rows, lanes)          # free reshape when pad == 0
    t2d = t_flat.reshape(rows, lanes)

    tile_rows = max(sublanes, (min(max_tile_rows, rows) // sublanes) * sublanes)
    n_blocks = pl.cdiv(rows, tile_rows)
    cores = max(1, min(num_cores, n_blocks))
    blocks_per_core = pl.cdiv(n_blocks, cores)       # last core may get phantoms
    mask_rows = (rows % tile_rows) != 0              # partial last real block
    last_blk = n_blocks - 1

    kernel = functools.partial(
        _l1_gamma_kernel,
        inv_gamma=1.0 / float(gamma),
        tile_rows=tile_rows,
        blocks_per_core=blocks_per_core,
        n_blocks=n_blocks,
        rows_valid=rows,
        mask_rows=mask_rows,
    )

    def in_map(c, i):
        blk = c * blocks_per_core + i
        # Clamp phantom trailing blocks to an in-bounds index; the kernel
        # skips their accumulation via `blk < n_blocks`.
        return (jnp.minimum(blk, last_blk), 0)

    # Raise the scoped VMEM limit only when big tiles need it (e.g. v7x tuning
    # with max_tile_rows >= 4096); default 1 MiB blocks stay under every
    # chip's scoped default (v5e 16 MiB included).
    per_block_bytes = tile_rows * lanes * 4
    est_vmem = 2 * 2 * per_block_bytes + 6 * per_block_bytes
    cp_kwargs = dict(dimension_semantics=(pltpu.PARALLEL, pltpu.ARBITRARY))
    if est_vmem > (12 << 20):
        cp_kwargs["vmem_limit_bytes"] = int(min(est_vmem + (8 << 20), 48 << 20))

    partials = pl.pallas_call(
        kernel,
        out_shape=jax.ShapeDtypeStruct((cores * sublanes, lanes), jnp.float32),
        grid_spec=pltpu.PrefetchScalarGridSpec(
            num_scalar_prefetch=0,
            grid=(cores, blocks_per_core),
            in_specs=[
                pl.BlockSpec((tile_rows, lanes), in_map),
                pl.BlockSpec((tile_rows, lanes), in_map),
            ],
            out_specs=pl.BlockSpec((sublanes, lanes), lambda c, i: (c, 0)),
        ),
        compiler_params=pltpu.CompilerParams(**cp_kwargs),
        cost_estimate=pl.CostEstimate(
            flops=10 * int(n_elems),
            transcendentals=4 * int(n_elems),      # 2x (log + exp) per element
            bytes_accessed=2 * prediction.dtype.itemsize * int(n_elems),
        ),
    )(p2d, t2d)

    # One tiny cross-lane reduce of the cores*8*128 partials, then the mean.
    return jnp.sum(partials) / jnp.float32(n_elems)


if __name__ == "__main__":
    key = jax.random.PRNGKey(0)
    k1, k2 = jax.random.split(key)

    # NCHW inputs, like the PyTorch module would receive.
    x_shape = (2, 4, 16, 16)
    prediction = jax.random.uniform(k1, x_shape, jnp.float32, minval=-0.2, maxval=1.2)
    target = jax.random.uniform(k2, x_shape, jnp.float32, minval=-0.2, maxval=1.2)

    loss = jax.block_until_ready(l1_with_gamma(prediction, target, gamma=2.2))

    # Pure-JAX reference (matches torch: clamp(0,1)**(1/gamma), then L1 mean).
    inv_g = 1.0 / 2.2
    p_ref = jnp.power(jnp.clip(prediction, 0.0, 1.0), inv_g)
    t_ref = jnp.power(jnp.clip(target, 0.0, 1.0), inv_g)
    ref = jnp.mean(jnp.abs(p_ref - t_ref))
    assert jnp.allclose(loss, ref, rtol=1e-5, atol=1e-6), (loss, ref)

    # Second small case exercising the ragged-tail mask, the 2-way core split
    # and the phantom-block skip path (5000 elems, tile_rows=16 -> 3 real
    # blocks over a 2x2 grid).
    y_shape = (2, 4, 25, 25)
    k3, k4 = jax.random.split(k2)
    p2 = jax.random.uniform(k3, y_shape, jnp.float32, minval=-0.2, maxval=1.2)
    t2 = jax.random.uniform(k4, y_shape, jnp.float32, minval=-0.2, maxval=1.2)
    loss2 = jax.block_until_ready(
        l1_with_gamma(p2, t2, gamma=2.2, max_tile_rows=16))
    ref2 = jnp.mean(jnp.abs(jnp.power(jnp.clip(p2, 0.0, 1.0), inv_g)
                            - jnp.power(jnp.clip(t2, 0.0, 1.0), inv_g)))
    assert jnp.allclose(loss2, ref2, rtol=1e-5, atol=1e-6), (loss2, ref2)

    print("KERNEL_OK")
</pallas_src>

<mosaic_0001>
module attributes {stable_mosaic.version = 11 : i64} {
  func.func @_l1_gamma_kernel(%arg0: i32, %arg1: i32, %arg2: memref<16x128xf32, #tpu.memory_space<vmem>>, %arg3: memref<16x128xf32, #tpu.memory_space<vmem>>, %arg4: memref<8x128xf32, #tpu.memory_space<vmem>>) attributes {dimension_semantics = [#tpu.dimension_semantics<parallel>, #tpu.dimension_semantics<arbitrary>], iteration_bounds = array<i64: 1, 1>, scalar_prefetch = 0 : i64, scratch_operands = 0 : i64, tpu.core_type = #tpu.core_type<tc>, window_params = [{transform_indices = @transform_0, window_bounds = array<i64: 16, 128>}, {transform_indices = @transform_1, window_bounds = array<i64: 16, 128>}, {transform_indices = @transform_2, window_bounds = array<i64: 8, 128>}]} {
    %c1_i32 = arith.constant 1 : i32
    %0 = arith.muli %arg0, %c1_i32 : i32
    %1 = arith.addi %0, %arg1 : i32
    %c0_i32 = arith.constant 0 : i32
    %2 = arith.cmpi eq, %arg1, %c0_i32 : i32
    %3 = arith.extui %2 : i1 to i32
    %c0_i32_0 = arith.constant 0 : i32
    %4 = arith.cmpi ne, %3, %c0_i32_0 : i32
    scf.if %4 {
      %cst_13 = arith.constant 0.000000e+00 : f32
      %32 = vector.broadcast %cst_13 : f32 to vector<8x128xf32>
      %c0_14 = arith.constant 0 : index
      %c0_15 = arith.constant 0 : index
      %33 = vector.load %arg4[%c0_14, %c0_15] : memref<8x128xf32, #tpu.memory_space<vmem>>, vector<8x128xf32>
      tpu.vector_store %arg4[%c0_14, %c0_15], %32 {strides = array<i32>} : memref<8x128xf32, #tpu.memory_space<vmem>>, vector<8x128xf32>,
    } else {
    }
    %c0 = arith.constant 0 : index
    %c0_1 = arith.constant 0 : index
    %5 = vector.load %arg2[%c0, %c0_1] : memref<16x128xf32, #tpu.memory_space<vmem>>, vector<16x128xf32>
    %cst = arith.constant 1.000000e+00 : f32
    %6 = vector.broadcast %cst : f32 to vector<16x128xf32>
    %7 = arith.minimumf %5, %6 : vector<16x128xf32>
    %c0_2 = arith.constant 0 : index
    %c0_3 = arith.constant 0 : index
    %8 = vector.load %arg3[%c0_2, %c0_3] : memref<16x128xf32, #tpu.memory_space<vmem>>, vector<16x128xf32>
    %cst_4 = arith.constant 1.000000e+00 : f32
    %9 = vector.broadcast %cst_4 : f32 to vector<16x128xf32>
    %10 = arith.minimumf %8, %9 : vector<16x128xf32>
    %cst_5 = arith.constant 0.000000e+00 : f32
    %11 = vector.broadcast %cst_5 : f32 to vector<16x128xf32>
    %12 = arith.cmpf ogt, %7, %11 : vector<16x128xf32>
    %13 = math.log %7 : vector<16x128xf32>
    %cst_6 = arith.constant 0.454545468 : f32
    %14 = vector.broadcast %cst_6 : f32 to vector<16x128xf32>
    %15 = arith.mulf %14, %13 : vector<16x128xf32>
    %16 = math.exp %15 : vector<16x128xf32>
    %cst_7 = arith.constant 0.000000e+00 : f32
    %17 = vector.broadcast %cst_7 : f32 to vector<16x128xf32>
    %18 = arith.select %12, %16, %17 : vector<16x128xi1>, vector<16x128xf32>
    %cst_8 = arith.constant 0.000000e+00 : f32
    %19 = vector.broadcast %cst_8 : f32 to vector<16x128xf32>
    %20 = arith.cmpf ogt, %10, %19 : vector<16x128xf32>
    %21 = math.log %10 : vector<16x128xf32>
    %cst_9 = arith.constant 0.454545468 : f32
    %22 = vector.broadcast %cst_9 : f32 to vector<16x128xf32>
    %23 = arith.mulf %22, %21 : vector<16x128xf32>
    %24 = math.exp %23 : vector<16x128xf32>
    %cst_10 = arith.constant 0.000000e+00 : f32
    %25 = vector.broadcast %cst_10 : f32 to vector<16x128xf32>
    %26 = arith.select %20, %24, %25 : vector<16x128xi1>, vector<16x128xf32>
    %27 = arith.subf %18, %26 : vector<16x128xf32>
    %28 = math.absf %27 : vector<16x128xf32>
    %c1_i32_11 = arith.constant 1 : i32
    %29 = arith.cmpi slt, %1, %c1_i32_11 : i32
    %30 = arith.extui %29 : i1 to i32
    %c0_i32_12 = arith.constant 0 : i32
    %31 = arith.cmpi ne, %30, %c0_i32_12 : i32
    scf.if %31 {
      %c0_13 = arith.constant 0 : index
      %c0_14 = arith.constant 0 : index
      %32 = vector.load %arg4[%c0_13, %c0_14] : memref<8x128xf32, #tpu.memory_space<vmem>>, vector<8x128xf32>
      %33 = vector.shape_cast %28 : vector<16x128xf32> to vector<2x8x128xf32>
      %cst_15 = arith.constant dense<0.000000e+00> : vector<8x128xf32>
      %34 = vector.multi_reduction <add>, %33, %cst_15 [0] : vector<2x8x128xf32> to vector<8x128xf32>
      %35 = arith.addf %32, %34 : vector<8x128xf32>
      %c0_16 = arith.constant 0 : index
      %c0_17 = arith.constant 0 : index
      %36 = vector.load %arg4[%c0_16, %c0_17] : memref<8x128xf32, #tpu.memory_space<vmem>>, vector<8x128xf32>
      tpu.vector_store %arg4[%c0_16, %c0_17], %35 {strides = array<i32>} : memref<8x128xf32, #tpu.memory_space<vmem>>, vector<8x128xf32>,
    } else {
    }
    return
  }
  func.func @transform_0(%arg0: i32, %arg1: i32) -> (i32, i32) {
    %c1_i32 = arith.constant 1 : i32
    %0 = arith.muli %arg0, %c1_i32 : i32
    %1 = arith.addi %0, %arg1 : i32
    %c0_i32 = arith.constant 0 : i32
    %2 = arith.minsi %1, %c0_i32 : i32
    %c0_i32_0 = arith.constant 0 : i32
    %c0_i32_1 = arith.constant 0 : i32
    return %2, %c0_i32_0 : i32, i32
  }
  func.func @transform_1(%arg0: i32, %arg1: i32) -> (i32, i32) {
    %c1_i32 = arith.constant 1 : i32
    %0 = arith.muli %arg0, %c1_i32 : i32
    %1 = arith.addi %0, %arg1 : i32
    %c0_i32 = arith.constant 0 : i32
    %2 = arith.minsi %1, %c0_i32 : i32
    %c0_i32_0 = arith.constant 0 : i32
    %c0_i32_1 = arith.constant 0 : i32
    return %2, %c0_i32_0 : i32, i32
  }
  func.func @transform_2(%arg0: i32, %arg1: i32) -> (i32, i32) {
    %c0_i32 = arith.constant 0 : i32
    %c0_i32_0 = arith.constant 0 : i32
    return %arg0, %c0_i32 : i32, i32
  }
}

</mosaic_0001>

<llo_original>
// kernel: tpu_custom_call.1
$region0: #{tpu_custom_call.1}
  #allocation0 [shape = 'u32[]', space=smem, size = 0x4, offset = 0x4, fixed_abs, tag = 'smem constant byte address 0x4 - core index']
  #allocation1 [shape = 'u32[72,128]{1,0:T(1,128)}', space=vmem, size = 0x9000, scoped, tag = 'internal scratch']
  %s0 = inlined_call_operand.hbm [shape: f32[16,128], index: 0, kind: input, shape index: {}]
  %s1 = inlined_call_operand.hbm [shape: f32[16,128], index: 1, kind: input, shape index: {}]
  %s2 = inlined_call_operand.hbm [shape: f32[8,128], index: 2, kind: output, shape index: {}]
  %s3 = sld [smem:[#allocation0]]
  $region34: #{tpu_custom_call.1} parent=0
    _
  %s5 = ssub.s32 1, %s3
  %s6 = scalar_select 0, %s5, %s3
  $region1: #{tpu_custom_call.1} parent=0
    #allocation2 [shape = 'u8[8192]{0}', space=vmem, size = 0x2000, scoped, tag = 'input window, operand 0, single buffered']
    #allocation3 [shape = 's32[1]{0}', space=sflag, size = 0x4, scoped, tag = 'scoped memory for tpu_custom_call.1']
    #allocation4 [shape = 's32[1]{0}', space=sflag, size = 0x4, scoped, tag = 'scoped memory for tpu_custom_call.1']
    #allocation5 [shape = 'u8[8192]{0}', space=vmem, size = 0x2000, scoped, tag = 'input window, operand 1, single buffered']
    #allocation6 [shape = 's32[1]{0}', space=sflag, size = 0x4, scoped, tag = 'scoped memory for tpu_custom_call.1']
    #allocation7 [shape = 'u8[4096]{0}', space=vmem, size = 0x1000, scoped, tag = 'output window, operand 0, single buffered']
    %7 = vsyncpa [#allocation3], 0
    %8 = vsyncpa [#allocation6], 0
    %9 = vsyncpa [#allocation4], 0
    // Predicated region
    $region2: #{tpu_custom_call.1} parent=1 // pred_check
      _
    $region3: #{tpu_custom_call.1} parent=1 // pred_check_branch
      %11 = sbr.rel (0) target = $region5
    $region4: #{tpu_custom_call.1} parent=1 // pred_region
      %s12 = sadd.s32 0, 0
      %p13 = scmp.lt.s32.totalorder %s12, 0
      %s14 = scalar_select %p13, %s12, 0
      %s15 = smul.u32 2, %s14
      %17 = vsyncadd [#allocation3], 0
      %s18 = smul.addr %s15, 8
      %s19 = scalar_lea.hbm %s0, %s18
      %s20 = sshll.u32 %s19, 4
      %s21 = int_to_ptr.hbm [resolvable:$true] %s20
      %s22 = sshll.u32 [#allocation2], 4
      %s23 = int_to_ptr.vmem [resolvable:$true] %s22
      %28 = dma.hbm_to_vmem [thread:$0]  %s21, 256, %s23, [#allocation3], 128, 128, 8
    $region5: #{tpu_custom_call.1} parent=1 // pred_fallthru
      _
    // Predicated region
    $region6: #{tpu_custom_call.1} parent=1 // pred_check
      _
    $region7: #{tpu_custom_call.1} parent=1 // pred_check_branch
      %30 = sbr.rel (0) target = $region9
    $region8: #{tpu_custom_call.1} parent=1 // pred_region
      %s31 = sadd.s32 0, 0
      %p32 = scmp.lt.s32.totalorder %s31, 0
      %s33 = scalar_select %p32, %s31, 0
      %s34 = smul.u32 2, %s33
      %36 = vsyncadd [#allocation6], 0
      %s37 = smul.addr %s34, 8
      %s38 = scalar_lea.hbm %s1, %s37
      %s39 = sshll.u32 %s38, 4
      %s40 = int_to_ptr.hbm [resolvable:$true] %s39
      %s41 = sshll.u32 [#allocation5], 4
      %s42 = int_to_ptr.vmem [resolvable:$true] %s41
      %47 = dma.hbm_to_vmem [thread:$0]  %s40, 256, %s42, [#allocation6], 128, 128, 8
    $region9: #{tpu_custom_call.1} parent=1 // pred_fallthru
      _
    // Predicated region
    $region10: #{tpu_custom_call.1} parent=1 // pred_check
      _
    $region11: #{tpu_custom_call.1} parent=1 // pred_check_branch
      %49 = sbr.rel (0) target = $region13
    $region12: #{tpu_custom_call.1} parent=1 // pred_region
      %51 = dma.done [#allocation3], 256
    $region13: #{tpu_custom_call.1} parent=1 // pred_fallthru
      _
    // Predicated region
    $region14: #{tpu_custom_call.1} parent=1 // pred_check
      _
    $region15: #{tpu_custom_call.1} parent=1 // pred_check_branch
      %53 = sbr.rel (0) target = $region17
    $region16: #{tpu_custom_call.1} parent=1 // pred_region
      %55 = dma.done [#allocation6], 256
    $region17: #{tpu_custom_call.1} parent=1 // pred_fallthru
      _
    %s56 = sadd.s32 0, 0
    %p57 = scmp.lt.s32.totalorder %s56, 0
    %s58 = scalar_select %p57, %s56, 0
    %s59 = smul.u32 2, %s58
    %s60 = sadd.s32 0, 0
    %p61 = scmp.lt.s32.totalorder %s60, 0
    %s62 = scalar_select %p61, %s60, 0
    %s63 = smul.u32 2, %s62
    %s64 = sadd.s32 0, 0
    %p65 = scmp.eq.s32.totalorder 0, 0
    // Predicated region
    $region18: #{tpu_custom_call.1} parent=1 // pred_check
      %p66 = pneg %p65
    $region19: #{tpu_custom_call.1} parent=1 // pred_check_branch
      %68 = sbr.rel (%p66) target = $region21
    $region20: #{tpu_custom_call.1} parent=1 // pred_region
      %69 = vst [vmem:[#allocation7] sm:$0xff] 0.0
    $region21: #{tpu_custom_call.1} parent=1 // pred_fallthru
      _
    %v70 = vld [vmem:[#allocation2] sm:$0xff]
    %v71 = vld [vmem:[#allocation2 + $0x8] sm:$0xff]
    %v72 = vmin.f32 %v70, 1.0
    %v73 = vmin.f32 %v71, 1.0
    %v74 = vld [vmem:[#allocation5] sm:$0xff]
    %v75 = vld [vmem:[#allocation5 + $0x8] sm:$0xff]
    %v76 = vmin.f32 %v74, 1.0
    %v77 = vmin.f32 %v75, 1.0
    %vm78 = vcmp.gt.f32.partialorder %v72, 0.0
    %vm79 = vcmp.gt.f32.partialorder %v73, 0.0
    %v80 = vlog2.pop %v72
    %v81 = vmul.f32 %v80, 0.6931472
    %v82 = vlog2.pop %v73
    %v83 = vmul.f32 %v82, 0.6931472
    %v84 = vmul.f32 %v81, 0.45454547
    %v85 = vmul.f32 %v83, 0.45454547
    %v86 = vmul.f32 %v84, 1.442695
    %v87 = vpow.pop %v86
    %v88 = vmul.f32 %v85, 1.442695
    %v89 = vpow.pop %v88
    %v90 = vsel %vm78, %v87, 0.0
    %v91 = vsel %vm79, %v89, 0.0
    %vm92 = vcmp.gt.f32.partialorder %v76, 0.0
    %vm93 = vcmp.gt.f32.partialorder %v77, 0.0
    %v94 = vlog2.pop %v76
    %v95 = vmul.f32 %v94, 0.6931472
    %v96 = vlog2.pop %v77
    %v97 = vmul.f32 %v96, 0.6931472
    %v98 = vmul.f32 %v95, 0.45454547
    %v99 = vmul.f32 %v97, 0.45454547
    %v100 = vmul.f32 %v98, 1.442695
    %v101 = vpow.pop %v100
    %v102 = vmul.f32 %v99, 1.442695
    %v103 = vpow.pop %v102
    %v104 = vsel %vm92, %v101, 0.0
    %v105 = vsel %vm93, %v103, 0.0
    %v106 = vsub.f32 %v90, %v104
    %v107 = vsub.f32 %v91, %v105
    %v108 = vand.u32 2147483647, %v106
    %v109 = vand.u32 2147483647, %v107
    %p110 = scmp.lt.s32.totalorder %s64, 1
    // Predicated region
    $region22: #{tpu_custom_call.1} parent=1 // pred_check
      %p111 = pneg %p110
    $region23: #{tpu_custom_call.1} parent=1 // pred_check_branch
      %113 = sbr.rel (%p111) target = $region25
    $region24: #{tpu_custom_call.1} parent=1 // pred_region
      %v114 = vld [vmem:[#allocation7] sm:$0xff]
      %v115 = vadd.f32 %v108, %v109
      %v116 = vadd.f32 %v114, %v115
      %117 = vst [vmem:[#allocation7] sm:$0xff] %v116
    $region25: #{tpu_custom_call.1} parent=1 // pred_fallthru
      _
    // Predicated region
    $region26: #{tpu_custom_call.1} parent=1 // pred_check
      _
    $region27: #{tpu_custom_call.1} parent=1 // pred_check_branch
      %119 = sbr.rel (0) target = $region29
    $region28: #{tpu_custom_call.1} parent=1 // pred_region
      %121 = vsyncadd [#allocation4], 0
      %s123 = sshll.u32 [#allocation7], 4
      %s124 = int_to_ptr.vmem [resolvable:$true] %s123
      %s125 = sshll.u32 %s2, 4
      %s126 = int_to_ptr.hbm [resolvable:$true] %s125
      %128 = dma.vmem_to_hbm [thread:$0]  %s124, 128, %s126, [#allocation4]
    $region29: #{tpu_custom_call.1} parent=1 // pred_fallthru
      _
    // Predicated region
    $region30: #{tpu_custom_call.1} parent=1 // pred_check
      _
    $region31: #{tpu_custom_call.1} parent=1 // pred_check_branch
      %130 = sbr.rel (0) target = $region33
    $region32: #{tpu_custom_call.1} parent=1 // pred_region
      %132 = dma.done [#allocation4], 128
    $region33: #{tpu_custom_call.1} parent=1 // pred_fallthru
      _
    %133 = vsyncpa [#allocation3], 1
    %134 = vsyncpa [#allocation6], 1
    %135 = vsyncpa [#allocation4], 1

</llo_original>
